<compile_context>
chip_gen: v5e
topology: v5e:2x2
jax: 0.10.0
libtpu: 0.0.40
codegen_flags: <defaults>
</compile_context>

<pallas_src>
import jax
import jax.numpy as jnp
from jax.experimental import pallas as pl
from jax.experimental.pallas import tpu as pltpu

IN_DIM = 192
HID = 64
NUM_ACTIONS = 7
PADDED_ACTIONS = 8          # pad 7 -> 8 so the output block is (tb, 8)
NEG_BIG = -1e30             # bias for padded action lane -> prob exactly 0


def ppo_actor_kernel(x_ref, w1_ref, b1_ref, w2_ref, b2_ref, w3_ref, b3_ref,
                     out_ref):
    # x tile: (TB, 192) from HBM; cast to bf16 only for the MXU.
    x = x_ref[...].astype(jnp.bfloat16)

    # fc1 + tanh  (bf16 matmul, f32 accumulate / activation)
    h1 = jnp.dot(x, w1_ref[...], preferred_element_type=jnp.float32)
    h1 = jnp.tanh(h1 + b1_ref[...])                       # (TB, 64) f32

    # fc2 + tanh
    h2 = jnp.dot(h1.astype(jnp.bfloat16), w2_ref[...],
                 preferred_element_type=jnp.float32)
    h2 = jnp.tanh(h2 + b2_ref[...])                       # (TB, 64) f32

    # fc3 (padded to 8 lanes).  The padded lane's bias is -1e30 (its weight
    # column is zero), so no explicit masking is needed before the softmax.
    logits = jnp.dot(h2.astype(jnp.bfloat16), w3_ref[...],
                     preferred_element_type=jnp.float32)
    logits = logits + b3_ref[...]                         # (TB, 8) f32

    # Numerically-safe softmax over 8 lanes (cheap: 3 rotate steps each).
    m = jnp.max(logits, axis=-1, keepdims=True)
    e = jnp.exp(logits - m)                               # padded lane -> 0
    denom = jnp.sum(e, axis=-1, keepdims=True)
    out_ref[...] = (e / denom).astype(out_ref.dtype)


def prepare_params(params):
    """One-time param prep (bf16 weights, fc3 padded to 8 lanes).

    Call once per parameter update, NOT per forward call.
    """
    w1, b1, w2, b2, w3, b3 = params
    w3p = jnp.zeros((w3.shape[0], PADDED_ACTIONS), jnp.bfloat16)
    w3p = w3p.at[:, :NUM_ACTIONS].set(w3.astype(jnp.bfloat16))
    b3p = jnp.full((1, PADDED_ACTIONS), NEG_BIG, jnp.float32)
    b3p = b3p.at[:, :NUM_ACTIONS].set(b3.reshape(1, -1).astype(jnp.float32))
    return (w1.astype(jnp.bfloat16), b1.reshape(1, -1).astype(jnp.float32),
            w2.astype(jnp.bfloat16), b2.reshape(1, -1).astype(jnp.float32),
            w3p, b3p)


def _tpu_budget():
    """Generation-aware (tile cap, vmem limit)."""
    try:
        vmem = pltpu.get_tpu_info().vmem_capacity_bytes
    except Exception:
        vmem = 64 << 20
    if vmem >= (96 << 20):          # v5e / v6e: 128 MiB physical VMEM
        return 4096, 64 << 20
    return 2048, 24 << 20           # v7x: 64 MiB physical VMEM


def _choose_tb(batch, tb_cap, min_grid_steps=4):
    """Tile so the grid has >= min_grid_steps steps, sublane-aligned, capped."""
    target = -(-batch // min_grid_steps)       # ceil(batch / steps)
    target = ((target + 7) // 8) * 8           # multiple of 8 sublanes
    return max(8, min(tb_cap, target))


def ppo_actor_forward(x, prepared_params):
    """x: (B, 192) float32/bfloat16. Returns (B, 7) softmax probs (float32)."""
    w1b, b1, w2b, b2, w3p, b3p = prepared_params
    B = x.shape[0]

    tb_cap, vmem_limit = _tpu_budget()
    tb = _choose_tb(B, tb_cap)
    Bp = ((B + tb - 1) // tb) * tb
    if Bp != B:
        x = jnp.pad(x, ((0, Bp - B), (0, 0)))
    grid = (Bp // tb,)

    const2d = lambda i: (0, 0)  # weights/biases stay VMEM-resident
    out_padded = pl.pallas_call(
        ppo_actor_kernel,
        out_shape=jax.ShapeDtypeStruct((Bp, PADDED_ACTIONS), jnp.float32),
        grid_spec=pltpu.PrefetchScalarGridSpec(
            num_scalar_prefetch=0,
            grid=grid,
            in_specs=[
                pl.BlockSpec((tb, IN_DIM), lambda i: (i, 0)),        # x tile
                pl.BlockSpec((IN_DIM, HID), const2d),                # w1
                pl.BlockSpec((1, HID), const2d),                     # b1
                pl.BlockSpec((HID, HID), const2d),                   # w2
                pl.BlockSpec((1, HID), const2d),                     # b2
                pl.BlockSpec((HID, PADDED_ACTIONS), const2d),        # w3 (padded)
                pl.BlockSpec((1, PADDED_ACTIONS), const2d),          # b3 (padded)
            ],
            out_specs=pl.BlockSpec((tb, PADDED_ACTIONS), lambda i: (i, 0)),
        ),
        compiler_params=pltpu.CompilerParams(
            dimension_semantics=("parallel",),   # shards batch across v7x TCs
            vmem_limit_bytes=vmem_limit,
        ),
    )(x, w1b, b1, w2b, b2, w3p, b3p)

    return out_padded[:B, :NUM_ACTIONS]


def init_params(key):
    """Deterministic init mirroring nn.Linear shapes (stored as (in, out))."""
    k1, k2, k3, k4, k5, k6 = jax.random.split(key, 6)

    def linear(kw, kb, fan_in, fan_out):
        bound = 1.0 / jnp.sqrt(fan_in)
        w = jax.random.uniform(kw, (fan_in, fan_out), jnp.float32, -bound, bound)
        b = jax.random.uniform(kb, (1, fan_out), jnp.float32, -bound, bound)
        return w, b

    w1, b1 = linear(k1, k2, IN_DIM, HID)
    w2, b2 = linear(k3, k4, HID, HID)
    w3, b3 = linear(k5, k6, HID, NUM_ACTIONS)
    return (w1, b1, w2, b2, w3, b3)


def _reference(x, params):
    w1, b1, w2, b2, w3, b3 = params
    h = jnp.tanh(x @ w1 + b1)
    h = jnp.tanh(h @ w2 + b2)
    return jax.nn.softmax(h @ w3 + b3, axis=-1)


if __name__ == "__main__":
    key = jax.random.PRNGKey(0)
    kx, kx2, kp = jax.random.split(key, 3)

    params = init_params(kp)
    prepped = prepare_params(params)   # hoisted: done once, reused per call

    # Small smoke test (single grid step).
    B = 8
    x = jax.random.normal(kx, (B, IN_DIM), dtype=jnp.float32)
    out = jax.block_until_ready(ppo_actor_forward(x, prepped))
    ref = _reference(x, params)
    assert out.shape == (B, NUM_ACTIONS)
    # bf16 MXU matmuls -> loosened tolerance vs f32 reference.
    assert jnp.allclose(out, ref, atol=2e-2, rtol=2e-2), jnp.max(jnp.abs(out - ref))
    assert jnp.allclose(jnp.sum(out, axis=-1), 1.0, atol=1e-3)

    # Ragged batch exercising a multi-step grid (padding rows sliced away).
    B2 = 100
    x2 = jax.random.normal(kx2, (B2, IN_DIM), dtype=jnp.float32)
    out2 = jax.block_until_ready(ppo_actor_forward(x2, prepped))
    ref2 = _reference(x2, params)
    assert out2.shape == (B2, NUM_ACTIONS)
    assert jnp.allclose(out2, ref2, atol=2e-2, rtol=2e-2), jnp.max(jnp.abs(out2 - ref2))
    assert jnp.allclose(jnp.sum(out2, axis=-1), 1.0, atol=1e-3)

    print("KERNEL_OK")
</pallas_src>

<mosaic_0001>
module attributes {stable_mosaic.version = 11 : i64} {
  func.func @ppo_actor_kernel(%arg0: i32, %arg1: memref<8x192xf32, #tpu.memory_space<vmem>>, %arg2: memref<192x64xbf16, #tpu.memory_space<vmem>>, %arg3: memref<1x64xf32, #tpu.memory_space<vmem>>, %arg4: memref<64x64xbf16, #tpu.memory_space<vmem>>, %arg5: memref<1x64xf32, #tpu.memory_space<vmem>>, %arg6: memref<64x8xbf16, #tpu.memory_space<vmem>>, %arg7: memref<1x8xf32, #tpu.memory_space<vmem>>, %arg8: memref<8x8xf32, #tpu.memory_space<vmem>>) attributes {dimension_semantics = [#tpu.dimension_semantics<parallel>], iteration_bounds = array<i64: 1>, scalar_prefetch = 0 : i64, scratch_operands = 0 : i64, tpu.core_type = #tpu.core_type<tc>, window_params = [{transform_indices = @transform_0, window_bounds = array<i64: 8, 192>}, {pipeline_mode = #tpu.pipeline_mode<synchronous>, transform_indices = @transform_1, window_bounds = array<i64: 192, 64>}, {pipeline_mode = #tpu.pipeline_mode<synchronous>, transform_indices = @transform_2, window_bounds = array<i64: 1, 64>}, {pipeline_mode = #tpu.pipeline_mode<synchronous>, transform_indices = @transform_3, window_bounds = array<i64: 64, 64>}, {pipeline_mode = #tpu.pipeline_mode<synchronous>, transform_indices = @transform_4, window_bounds = array<i64: 1, 64>}, {pipeline_mode = #tpu.pipeline_mode<synchronous>, transform_indices = @transform_5, window_bounds = array<i64: 64, 8>}, {pipeline_mode = #tpu.pipeline_mode<synchronous>, transform_indices = @transform_6, window_bounds = array<i64: 1, 8>}, {transform_indices = @transform_7, window_bounds = array<i64: 8, 8>}]} {
    %c0 = arith.constant 0 : index
    %c0_0 = arith.constant 0 : index
    %0 = vector.load %arg1[%c0, %c0_0] : memref<8x192xf32, #tpu.memory_space<vmem>>, vector<8x192xf32>
    %1 = arith.truncf %0 : vector<8x192xf32> to vector<8x192xbf16>
    %c0_1 = arith.constant 0 : index
    %c0_2 = arith.constant 0 : index
    %2 = vector.load %arg2[%c0_1, %c0_2] : memref<192x64xbf16, #tpu.memory_space<vmem>>, vector<192x64xbf16>
    %cst = arith.constant dense<0.000000e+00> : vector<8x64xf32>
    %3 = tpu.matmul %1, %2, %cst {dimension_numbers = #tpu.dot_dimension_numbers<[1], [0], [0], [1], [0, 0, 1, 1], [], []>} : vector<8x192xbf16>, vector<192x64xbf16>, vector<8x64xf32> -> vector<8x64xf32>
    %c0_3 = arith.constant 0 : index
    %c0_4 = arith.constant 0 : index
    %4 = vector.load %arg3[%c0_3, %c0_4] : memref<1x64xf32, #tpu.memory_space<vmem>>, vector<1x64xf32>
    %5 = vector.broadcast %4 : vector<1x64xf32> to vector<8x64xf32>
    %6 = arith.addf %3, %5 : vector<8x64xf32>
    %7 = math.tanh %6 : vector<8x64xf32>
    %8 = arith.truncf %7 : vector<8x64xf32> to vector<8x64xbf16>
    %c0_5 = arith.constant 0 : index
    %c0_6 = arith.constant 0 : index
    %9 = vector.load %arg4[%c0_5, %c0_6] : memref<64x64xbf16, #tpu.memory_space<vmem>>, vector<64x64xbf16>
    %cst_7 = arith.constant dense<0.000000e+00> : vector<8x64xf32>
    %10 = tpu.matmul %8, %9, %cst_7 {dimension_numbers = #tpu.dot_dimension_numbers<[1], [0], [0], [1], [0, 0, 1, 1], [], []>} : vector<8x64xbf16>, vector<64x64xbf16>, vector<8x64xf32> -> vector<8x64xf32>
    %c0_8 = arith.constant 0 : index
    %c0_9 = arith.constant 0 : index
    %11 = vector.load %arg5[%c0_8, %c0_9] : memref<1x64xf32, #tpu.memory_space<vmem>>, vector<1x64xf32>
    %12 = vector.broadcast %11 : vector<1x64xf32> to vector<8x64xf32>
    %13 = arith.addf %10, %12 : vector<8x64xf32>
    %14 = math.tanh %13 : vector<8x64xf32>
    %15 = arith.truncf %14 : vector<8x64xf32> to vector<8x64xbf16>
    %c0_10 = arith.constant 0 : index
    %c0_11 = arith.constant 0 : index
    %16 = vector.load %arg6[%c0_10, %c0_11] : memref<64x8xbf16, #tpu.memory_space<vmem>>, vector<64x8xbf16>
    %cst_12 = arith.constant dense<0.000000e+00> : vector<8x8xf32>
    %17 = tpu.matmul %15, %16, %cst_12 {dimension_numbers = #tpu.dot_dimension_numbers<[1], [0], [0], [1], [0, 0, 1, 1], [], []>} : vector<8x64xbf16>, vector<64x8xbf16>, vector<8x8xf32> -> vector<8x8xf32>
    %c0_13 = arith.constant 0 : index
    %c0_14 = arith.constant 0 : index
    %18 = vector.load %arg7[%c0_13, %c0_14] : memref<1x8xf32, #tpu.memory_space<vmem>>, vector<1x8xf32>
    %19 = vector.broadcast %18 : vector<1x8xf32> to vector<8x8xf32>
    %20 = arith.addf %17, %19 : vector<8x8xf32>
    %cst_15 = arith.constant dense<0xFF800000> : vector<8xf32>
    %21 = vector.multi_reduction <maximumf>, %20, %cst_15 [1] : vector<8x8xf32> to vector<8xf32>
    %22 = vector.shape_cast %21 : vector<8xf32> to vector<8x1xf32>
    %23 = vector.broadcast %22 : vector<8x1xf32> to vector<8x8xf32>
    %24 = arith.subf %20, %23 : vector<8x8xf32>
    %25 = math.exp %24 : vector<8x8xf32>
    %cst_16 = arith.constant dense<0.000000e+00> : vector<8xf32>
    %26 = vector.multi_reduction <add>, %25, %cst_16 [1] : vector<8x8xf32> to vector<8xf32>
    %27 = vector.shape_cast %26 : vector<8xf32> to vector<8x1xf32>
    %28 = vector.broadcast %27 : vector<8x1xf32> to vector<8x8xf32>
    %29 = arith.divf %25, %28 : vector<8x8xf32>
    %c0_17 = arith.constant 0 : index
    %c0_18 = arith.constant 0 : index
    %30 = vector.load %arg8[%c0_17, %c0_18] : memref<8x8xf32, #tpu.memory_space<vmem>>, vector<8x8xf32>
    tpu.vector_store %arg8[%c0_17, %c0_18], %29 {strides = array<i32>} : memref<8x8xf32, #tpu.memory_space<vmem>>, vector<8x8xf32>,
    return
  }
  func.func @transform_0(%arg0: i32) -> (i32, i32) {
    %c0_i32 = arith.constant 0 : i32
    %c0_i32_0 = arith.constant 0 : i32
    return %arg0, %c0_i32 : i32, i32
  }
  func.func @transform_1(%arg0: i32) -> (i32, i32) {
    %c0_i32 = arith.constant 0 : i32
    %c0_i32_0 = arith.constant 0 : i32
    %c0_i32_1 = arith.constant 0 : i32
    return %c0_i32, %c0_i32_0 : i32, i32
  }
  func.func @transform_2(%arg0: i32) -> (i32, i32) {
    %c0_i32 = arith.constant 0 : i32
    %c0_i32_0 = arith.constant 0 : i32
    %c0_i32_1 = arith.constant 0 : i32
    return %c0_i32, %c0_i32_0 : i32, i32
  }
  func.func @transform_3(%arg0: i32) -> (i32, i32) {
    %c0_i32 = arith.constant 0 : i32
    %c0_i32_0 = arith.constant 0 : i32
    %c0_i32_1 = arith.constant 0 : i32
    return %c0_i32, %c0_i32_0 : i32, i32
  }
  func.func @transform_4(%arg0: i32) -> (i32, i32) {
    %c0_i32 = arith.constant 0 : i32
    %c0_i32_0 = arith.constant 0 : i32
    %c0_i32_1 = arith.constant 0 : i32
    return %c0_i32, %c0_i32_0 : i32, i32
  }
  func.func @transform_5(%arg0: i32) -> (i32, i32) {
    %c0_i32 = arith.constant 0 : i32
    %c0_i32_0 = arith.constant 0 : i32
    %c0_i32_1 = arith.constant 0 : i32
    return %c0_i32, %c0_i32_0 : i32, i32
  }
  func.func @transform_6(%arg0: i32) -> (i32, i32) {
    %c0_i32 = arith.constant 0 : i32
    %c0_i32_0 = arith.constant 0 : i32
    %c0_i32_1 = arith.constant 0 : i32
    return %c0_i32, %c0_i32_0 : i32, i32
  }
  func.func @transform_7(%arg0: i32) -> (i32, i32) {
    %c0_i32 = arith.constant 0 : i32
    %c0_i32_0 = arith.constant 0 : i32
    return %arg0, %c0_i32 : i32, i32
  }
}

</mosaic_0001>

<llo_original>
// kernel: tpu_custom_call.1
$region0: #{tpu_custom_call.1}
  #allocation0 [shape = 'u32[]', space=smem, size = 0x4, offset = 0x4, fixed_abs, tag = 'smem constant byte address 0x4 - core index']
  #allocation1 [shape = 'u32[72,128]{1,0:T(1,128)}', space=vmem, size = 0x9000, scoped, tag = 'internal scratch']
  %s0 = inlined_call_operand.vmem [shape: f32[8,192], index: 0, kind: input, shape index: {}]
  %s1 = inlined_call_operand.vmem [shape: bf16[192,64], index: 1, kind: input, shape index: {}]
  %s2 = inlined_call_operand.vmem [shape: f32[1,64], index: 2, kind: input, shape index: {}]
  %s3 = inlined_call_operand.vmem [shape: bf16[64,64], index: 3, kind: input, shape index: {}]
  %s4 = inlined_call_operand.vmem [shape: f32[1,64], index: 4, kind: input, shape index: {}]
  %s5 = inlined_call_operand.vmem [shape: bf16[64,8], index: 5, kind: input, shape index: {}]
  %s6 = inlined_call_operand.vmem [shape: f32[1,8], index: 6, kind: input, shape index: {}]
  %s7 = inlined_call_operand.hbm [shape: f32[8,8], index: 7, kind: output, shape index: {}]
  %s8 = sld [smem:[#allocation0]]
  $region38: #{tpu_custom_call.1} parent=0
    _
  %s10 = ssub.s32 1, %s8
  %s11 = scalar_select 0, %s10, %s8
  $region1: #{tpu_custom_call.1} parent=0
    #allocation2 [shape = 'u8[4096]{0}', space=vmem, size = 0x1000, scoped, tag = 'output window, operand 0, single buffered']
    #allocation3 [shape = 's32[1]{0}', space=sflag, size = 0x4, scoped, tag = 'scoped memory for tpu_custom_call.1']
    %12 = vsyncpa [#allocation3], 0
    // Predicated region
    $region2: #{tpu_custom_call.1} parent=1 // pred_check
      _
    $region3: #{tpu_custom_call.1} parent=1 // pred_check_branch
      %14 = sbr.rel (0) target = $region5
    $region4: #{tpu_custom_call.1} parent=1 // pred_region
      _
    $region5: #{tpu_custom_call.1} parent=1 // pred_fallthru
      _
    // Predicated region
    $region6: #{tpu_custom_call.1} parent=1 // pred_check
      _
    $region7: #{tpu_custom_call.1} parent=1 // pred_check_branch
      %16 = sbr.rel (0) target = $region9
    $region8: #{tpu_custom_call.1} parent=1 // pred_region
      _
    $region9: #{tpu_custom_call.1} parent=1 // pred_fallthru
      _
    // Predicated region
    $region10: #{tpu_custom_call.1} parent=1 // pred_check
      _
    $region11: #{tpu_custom_call.1} parent=1 // pred_check_branch
      %18 = sbr.rel (0) target = $region13
    $region12: #{tpu_custom_call.1} parent=1 // pred_region
      _
    $region13: #{tpu_custom_call.1} parent=1 // pred_fallthru
      _
    // Predicated region
    $region14: #{tpu_custom_call.1} parent=1 // pred_check
      _
    $region15: #{tpu_custom_call.1} parent=1 // pred_check_branch
      %20 = sbr.rel (0) target = $region17
    $region16: #{tpu_custom_call.1} parent=1 // pred_region
      _
    $region17: #{tpu_custom_call.1} parent=1 // pred_fallthru
      _
    // Predicated region
    $region18: #{tpu_custom_call.1} parent=1 // pred_check
      _
    $region19: #{tpu_custom_call.1} parent=1 // pred_check_branch
      %22 = sbr.rel (0) target = $region21
    $region20: #{tpu_custom_call.1} parent=1 // pred_region
      _
    $region21: #{tpu_custom_call.1} parent=1 // pred_fallthru
      _
    // Predicated region
    $region22: #{tpu_custom_call.1} parent=1 // pred_check
      _
    $region23: #{tpu_custom_call.1} parent=1 // pred_check_branch
      %24 = sbr.rel (0) target = $region25
    $region24: #{tpu_custom_call.1} parent=1 // pred_region
      _
    $region25: #{tpu_custom_call.1} parent=1 // pred_fallthru
      _
    // Predicated region
    $region26: #{tpu_custom_call.1} parent=1 // pred_check
      _
    $region27: #{tpu_custom_call.1} parent=1 // pred_check_branch
      %26 = sbr.rel (0) target = $region29
    $region28: #{tpu_custom_call.1} parent=1 // pred_region
      _
    $region29: #{tpu_custom_call.1} parent=1 // pred_fallthru
      _
    %v28 = vld [vmem:[%s0] sm:$0xff]
    %v29 = vld [vmem:[%s0 + $0x8] sm:$0xff]
    %v30 = vpack.c.bf16 %v28, %v28
    %v31 = vpack.c.bf16 %v29, %v29
    %v32 = vld [vmem:[%s1] sm:$0xf]
    %v33 = vld [vmem:[%s1 + $0x4] sm:$0xf]
    %v34 = vld [vmem:[%s1 + $0x8] sm:$0xf]
    %v35 = vld [vmem:[%s1 + $0xc] sm:$0xf]
    %v36 = vld [vmem:[%s1 + $0x10] sm:$0xf]
    %v37 = vld [vmem:[%s1 + $0x14] sm:$0xf]
    %v38 = vld [vmem:[%s1 + $0x18] sm:$0xf]
    %v39 = vld [vmem:[%s1 + $0x1c] sm:$0xf]
    %v40 = vld [vmem:[%s1 + $0x20] sm:$0xf]
    %v41 = vld [vmem:[%s1 + $0x24] sm:$0xf]
    %v42 = vld [vmem:[%s1 + $0x28] sm:$0xf]
    %v43 = vld [vmem:[%s1 + $0x2c] sm:$0xf]
    %v44 = vld [vmem:[%s1 + $0x30] sm:$0xf]
    %v45 = vld [vmem:[%s1 + $0x34] sm:$0xf]
    %v46 = vld [vmem:[%s1 + $0x38] sm:$0xf]
    %v47 = vld [vmem:[%s1 + $0x3c] sm:$0xf]
    %v48 = vld [vmem:[%s1 + $0x40] sm:$0xf]
    %v49 = vld [vmem:[%s1 + $0x44] sm:$0xf]
    %v50 = vld [vmem:[%s1 + $0x48] sm:$0xf]
    %v51 = vld [vmem:[%s1 + $0x4c] sm:$0xf]
    %v52 = vld [vmem:[%s1 + $0x50] sm:$0xf]
    %v53 = vld [vmem:[%s1 + $0x54] sm:$0xf]
    %v54 = vld [vmem:[%s1 + $0x58] sm:$0xf]
    %v55 = vld [vmem:[%s1 + $0x5c] sm:$0xf]
    %v56 = vld [vmem:[%s2] sm:$0x1]
    %v58 = vperm.slane %v56, 0
    %v84 = vunpack.c.l.b16 %v32
    %v85 = vunpack.c.l.b16 %v33
    %v86 = vunpack.c.l.b16 %v34
    %v87 = vunpack.c.l.b16 %v35
    %v88 = vunpack.c.l.b16 %v36
    %v89 = vunpack.c.l.b16 %v37
    %v90 = vunpack.c.l.b16 %v38
    %v91 = vunpack.c.l.b16 %v39
    %v92 = vunpack.c.l.b16 %v40
    %v93 = vunpack.c.l.b16 %v41
    %v94 = vunpack.c.l.b16 %v42
    %v95 = vunpack.c.l.b16 %v43
    %v96 = vunpack.c.l.b16 %v44
    %v97 = vunpack.c.l.b16 %v45
    %v98 = vunpack.c.l.b16 %v46
    %v99 = vunpack.c.l.b16 %v47
    %v100 = vunpack.c.l.b16 %v48
    %v101 = vunpack.c.l.b16 %v49
    %v102 = vunpack.c.l.b16 %v50
    %v103 = vunpack.c.l.b16 %v51
    %v104 = vunpack.c.l.b16 %v52
    %v105 = vunpack.c.l.b16 %v53
    %v106 = vunpack.c.l.b16 %v54
    %v107 = vunpack.c.l.b16 %v55
    %v108 = vpack.c.b16 %v85, %v84
    %v109 = vpack.c.b16 %v87, %v86
    %v110 = vpack.c.b16 %v89, %v88
    %v111 = vpack.c.b16 %v91, %v90
    %v112 = vpack.c.b16 %v93, %v92
    %v113 = vpack.c.b16 %v95, %v94
    %v114 = vpack.c.b16 %v97, %v96
    %v115 = vpack.c.b16 %v99, %v98
    %v116 = vpack.c.b16 %v101, %v100
    %v117 = vpack.c.b16 %v103, %v102
    %v118 = vpack.c.b16 %v105, %v104
    %v119 = vpack.c.b16 %v107, %v106
    %vm132 = vcmask 523264
    %v134 = vsel %vm132, %v31, 0
    %136 = vmatpush.bf16.msra.mxu0 %v115
    %137 = vmatpush.bf16.msra.mxu0 %v114
    %138 = vmatpush.bf16.msra.mxu0 %v113
    %139 = vmatpush.bf16.msra.mxu0 %v112
    %140 = vmatpush.bf16.msra.mxu0 %v111
    %141 = vmatpush.bf16.msra.mxu0 %v110
    %142 = vmatpush.bf16.msra.mxu0 %v109
    %143 = vmatpush.bf16.msra.mxu0 %v108
    %144 = vmatmul.bf16.gmra.mxu0 %v30
    %v145 = vpop.f32.mrf.mxu0
    %v146 = vadd.f32 %v58, %v145
    %v147 = vpop.f32.mrf.mxu0
    %148 = vdwg.mxu0
    %149 = vmatpush.bf16.msra.mxu0 0
    %150 = vmatpush.bf16.msra.mxu0 0
    %151 = vmatpush.bf16.msra.mxu0 0
    %152 = vmatpush.bf16.msra.mxu0 0
    %153 = vmatpush.bf16.msra.mxu0 %v119
    %154 = vmatpush.bf16.msra.mxu0 %v118
    %155 = vmatpush.bf16.msra.mxu0 %v117
    %156 = vmatpush.bf16.msra.mxu0 %v116
    %157 = vmatmul.bf16.gmra.mxu0 %v134
    %v158 = vpop.f32.mrf.mxu0
    %v159 = vadd.f32 %v146, %v158
    %v160 = vpop.f32.mrf.mxu0
    %161 = vdwg.mxu0
    %v162 = vtanh.pop %v159
    %v163 = vpack.c.bf16 %v162, %v162
    %v164 = vld [vmem:[%s3] sm:$0xf]
    %v165 = vld [vmem:[%s3 + $0x4] sm:$0xf]
    %v166 = vld [vmem:[%s3 + $0x8] sm:$0xf]
    %v167 = vld [vmem:[%s3 + $0xc] sm:$0xf]
    %v168 = vld [vmem:[%s3 + $0x10] sm:$0xf]
    %v169 = vld [vmem:[%s3 + $0x14] sm:$0xf]
    %v170 = vld [vmem:[%s3 + $0x18] sm:$0xf]
    %v171 = vld [vmem:[%s3 + $0x1c] sm:$0xf]
    %v172 = vld [vmem:[%s4] sm:$0x1]
    %v174 = vperm.slane %v172, 0
    %v184 = vunpack.c.l.b16 %v164
    %v185 = vunpack.c.l.b16 %v165
    %v186 = vunpack.c.l.b16 %v166
    %v187 = vunpack.c.l.b16 %v167
    %v188 = vunpack.c.l.b16 %v168
    %v189 = vunpack.c.l.b16 %v169
    %v190 = vunpack.c.l.b16 %v170
    %v191 = vunpack.c.l.b16 %v171
    %v192 = vpack.c.b16 %v185, %v184
    %v193 = vpack.c.b16 %v187, %v186
    %v194 = vpack.c.b16 %v189, %v188
    %v195 = vpack.c.b16 %v191, %v190
    %v201 = vsel %vm132, %v163, 0
    %203 = vmatpush.bf16.msra.mxu0 0
    %204 = vmatpush.bf16.msra.mxu0 0
    %205 = vmatpush.bf16.msra.mxu0 0
    %206 = vmatpush.bf16.msra.mxu0 0
    %207 = vmatpush.bf16.msra.mxu0 %v195
    %208 = vmatpush.bf16.msra.mxu0 %v194
    %209 = vmatpush.bf16.msra.mxu0 %v193
    %210 = vmatpush.bf16.msra.mxu0 %v192
    %211 = vmatmul.bf16.gmra.mxu0 %v201
    %v212 = vpop.f32.mrf.mxu0
    %v213 = vadd.f32 %v174, %v212
    %v214 = vpop.f32.mrf.mxu0
    %215 = vdwg.mxu0
    %v216 = vtanh.pop %v213
    %v217 = vpack.c.bf16 %v216, %v216
    %v218 = vld [vmem:[%s5] sm:$0xf]
    %v219 = vld [vmem:[%s5 + $0x4] sm:$0xf]
    %v220 = vld [vmem:[%s5 + $0x8] sm:$0xf]
    %v221 = vld [vmem:[%s5 + $0xc] sm:$0xf]
    %v222 = vld [vmem:[%s5 + $0x10] sm:$0xf]
    %v223 = vld [vmem:[%s5 + $0x14] sm:$0xf]
    %v224 = vld [vmem:[%s5 + $0x18] sm:$0xf]
    %v225 = vld [vmem:[%s5 + $0x1c] sm:$0xf]
    %v226 = vld [vmem:[%s6] sm:$0x1]
    %v228 = vperm.slane %v226, 0
    %v238 = vunpack.c.l.b16 %v218
    %v239 = vunpack.c.l.b16 %v219
    %v240 = vunpack.c.l.b16 %v220
    %v241 = vunpack.c.l.b16 %v221
    %v242 = vunpack.c.l.b16 %v222
    %v243 = vunpack.c.l.b16 %v223
    %v244 = vunpack.c.l.b16 %v224
    %v245 = vunpack.c.l.b16 %v225
    %v246 = vpack.c.b16 %v239, %v238
    %v247 = vpack.c.b16 %v241, %v240
    %v248 = vpack.c.b16 %v243, %v242
    %v249 = vpack.c.b16 %v245, %v244
    %v255 = vsel %vm132, %v217, 0
    %257 = vmatpush.bf16.msra.mxu0 0
    %258 = vmatpush.bf16.msra.mxu0 0
    %259 = vmatpush.bf16.msra.mxu0 0
    %260 = vmatpush.bf16.msra.mxu0 0
    %261 = vmatpush.bf16.msra.mxu0 %v249
    %262 = vmatpush.bf16.msra.mxu0 %v248
    %263 = vmatpush.bf16.msra.mxu0 %v247
    %264 = vmatpush.bf16.msra.mxu0 %v246
    %265 = vmatmul.bf16.gmra.mxu0 %v255
    %v266 = vpop.f32.mrf.mxu0
    %v267 = vadd.f32 %v228, %v266
    %v268 = vpop.f32.mrf.mxu0
    %269 = vdwg.mxu0
    %vm270 = vcmask 64512
    %v271 = vsel %vm270, %v267, -inf
    %272 = vmax.xlane.f32.xlu0 %v271
    %v273 = vpop.xlane.xlu0 %272
    %v274 = vsub.f32 %v267, %v273
    %v275 = vmul.f32 %v274, 1.442695
    %v276 = vpow.pop %v275
    %v277 = vsel %vm270, %v276, 0.0
    %278 = vadd.xlane.f32.xlu0 %v277
    %v279 = vpop.xlane.xlu0 %278
    %v280 = vrcp.pop %v279
    %v281 = vmul.f32 %v279, %v280
    %v282 = vsub.f32 1.0, %v281
    %v283 = vmul.f32 %v280, %v282
    %v284 = vadd.f32 %v280, %v283
    %vm285 = vweird.f32 %v279
    %vm286 = vweird.f32 %v280
    %vm287 = vmor %vm285, %vm286
    %v288 = vsel %vm287, %v280, %v284
    %v289 = vand.u32 2147483647, %v279
    %vm290 = vcmp.eq.f32.partialorder %v289, 8.507059e+37
    %v291 = vand.u32 %v279, 2147483648
    %v292 = vor.u32 1.1754944e-38, %v291
    %v293 = vsel %vm290, %v292, %v288
    %v294 = vmul.f32 %v276, %v293
    %295 = vst.msk [vmem:[#allocation2] sm:$0xff] %vm270, %v294
    // Predicated region
    $region30: #{tpu_custom_call.1} parent=1 // pred_check
      _
    $region31: #{tpu_custom_call.1} parent=1 // pred_check_branch
      %297 = sbr.rel (0) target = $region33
    $region32: #{tpu_custom_call.1} parent=1 // pred_region
      %299 = vsyncadd [#allocation3], 0
      %s301 = sshll.u32 [#allocation2], 4
      %s302 = int_to_ptr.vmem [resolvable:$true] %s301
      %s303 = sshll.u32 %s7, 4
      %s304 = int_to_ptr.hbm [resolvable:$true] %s303
      %306 = dma.vmem_to_hbm [thread:$0]  %s302, 128, %s304, [#allocation3]
    $region33: #{tpu_custom_call.1} parent=1 // pred_fallthru
      _
    // Predicated region
    $region34: #{tpu_custom_call.1} parent=1 // pred_check
      _
    $region35: #{tpu_custom_call.1} parent=1 // pred_check_branch
      %308 = sbr.rel (0) target = $region37
    $region36: #{tpu_custom_call.1} parent=1 // pred_region
      %310 = dma.done [#allocation3], 128
    $region37: #{tpu_custom_call.1} parent=1 // pred_fallthru
      _
    %311 = vsyncpa [#allocation3], 1

</llo_original>
